<compile_context>
chip_gen: v5e
topology: v5e:2x2
jax: 0.10.0
libtpu: 0.0.40
codegen_flags: <defaults>
</compile_context>

<pallas_src>
import functools

import jax
import jax.numpy as jnp
from jax.experimental import pallas as pl
from jax.experimental.pallas import tpu as pltpu


def _round_up(a, b):
    return ((a + b - 1) // b) * b


def conv1x1_add_kernel(w_ref, b_ref, x_ref, other_ref, o_ref):
    # w_ref:     (Cout, Cin)   tiny resident VMEM block
    # b_ref:     (Cout, 1)     tiny resident VMEM block
    # x_ref:     (Cin, TP)     pixels on lanes
    # other_ref: (Cout, TP)
    # o_ref:     (Cout, TP)    lane-dense full-tile store
    cin = x_ref.shape[0]
    w = w_ref[...]                               # (Cout, Cin)
    x = x_ref[...]                               # (Cin, TP)
    # bias folded into the initial accumulator (lane-broadcast once)
    acc = other_ref[...] + b_ref[...]            # (Cout, TP)
    # hoisted weight-column views; unrolled VPU MAC over K = Cin = 3
    w_cols = [w[:, ci:ci + 1] for ci in range(cin)]      # each (Cout, 1)
    for ci in range(cin):
        acc = acc + w_cols[ci] * x[ci:ci + 1, :]          # (Cout,1)*(1,TP)
    o_ref[...] = acc.astype(o_ref.dtype)


@functools.partial(jax.jit, static_argnames=("tp_max",))
def conv1x1_pad1_add(x_nchw, other_nchw, weight, bias, *, tp_max=32768):
    """x_nchw: (N, Cin, H, W); other_nchw: (N, Cout, H+2, W+2);
    weight: (Cout, Cin) (1x1 kernel squeezed); bias: (Cout,)."""
    N, Cin, H, W = x_nchw.shape
    Cout = weight.shape[0]
    Hp, Wp = H + 2, W + 2
    P = N * Hp * Wp

    # conv padding=1: spatial zero border (border pixels of x2d are exact
    # zeros, so the same kernel yields bias + other there).
    # TODO(synk): the pad+transpose+reshape chain is one fused XLA copy of x;
    # could be removed entirely by handling the 1-pixel border in the wrapper.
    x_pad = jnp.pad(x_nchw, ((0, 0), (0, 0), (1, 1), (1, 1)))

    # channel-major 2-D views: (C, N*Hp*Wp) — pixel axis lands on the lanes.
    # (For N == 1 these transposes are layout no-ops.)
    x2d = jnp.transpose(x_pad, (1, 0, 2, 3)).reshape(Cin, P)
    other2d = jnp.transpose(other_nchw, (1, 0, 2, 3)).reshape(Cout, P)

    # Tile selection: large (amortize ~0.35us/step), 128-aligned, and at least
    # 2 (even) tiles so v7x's two TensorCores both get work on the parallel
    # pixel axis.  No tail padding: Pallas masks the ragged last block.
    num_tiles = max(2, pl.cdiv(P, tp_max))
    if num_tiles % 2:
        num_tiles += 1
    TP = min(tp_max, _round_up(pl.cdiv(P, num_tiles), 128))
    grid = pl.cdiv(P, TP)

    w = weight.astype(jnp.float32)                      # (Cout, Cin)
    b = bias.reshape(Cout, 1).astype(jnp.float32)       # (Cout, 1)

    out2d = pl.pallas_call(
        conv1x1_add_kernel,
        out_shape=jax.ShapeDtypeStruct((Cout, P), jnp.float32),
        grid=(grid,),
        in_specs=[
            pl.BlockSpec((Cout, Cin), lambda i: (0, 0)),   # weights (resident)
            pl.BlockSpec((Cout, 1), lambda i: (0, 0)),     # bias    (resident)
            pl.BlockSpec((Cin, TP), lambda i: (0, i)),     # x tile
            pl.BlockSpec((Cout, TP), lambda i: (0, i)),    # other tile
        ],
        out_specs=pl.BlockSpec((Cout, TP), lambda i: (0, i)),
        compiler_params=pltpu.CompilerParams(
            dimension_semantics=("parallel",)),
    )(w, b, x2d, other2d)

    # (Cout, P) -> (N, Cout, Hp, Wp)
    out = out2d.reshape(Cout, N, Hp, Wp)
    return jnp.transpose(out, (1, 0, 2, 3))


if __name__ == "__main__":
    # small shapes consistent with the module: N=1, Cin=3, H=W=16, Cout=8
    N, Cin, H, W, Cout = 1, 3, 16, 16, 8
    key = jax.random.PRNGKey(0)
    k1, k2, k3, k4 = jax.random.split(key, 4)

    x1 = jax.random.normal(k1, (N, Cin, H, W), dtype=jnp.float32)
    other = jax.random.normal(k2, (N, Cout, H + 2, W + 2), dtype=jnp.float32)

    # deterministic Conv2d(3, 8, 1) parameters (1x1 kernel squeezed to (Cout, Cin))
    weight = jax.random.normal(k3, (Cout, Cin), dtype=jnp.float32) * 0.1
    bias = jax.random.normal(k4, (Cout,), dtype=jnp.float32) * 0.1

    out = conv1x1_pad1_add(x1, other, weight, bias)
    out = jax.block_until_ready(out)

    # pure-JAX reference: pad, 1x1 conv via einsum, add bias and other
    x_pad = jnp.pad(x1, ((0, 0), (0, 0), (1, 1), (1, 1)))
    ref = jnp.einsum("nchw,oc->nohw", x_pad, weight) + bias[None, :, None, None] + other
    assert out.shape == (N, Cout, H + 2, W + 2)
    assert jnp.allclose(out, ref, atol=1e-4, rtol=1e-4)

    print("KERNEL_OK")
</pallas_src>

<mosaic_0001>
module attributes {stable_mosaic.version = 11 : i64} {
  func.func @conv1x1_add_kernel(%arg0: i32, %arg1: memref<8x3xf32, #tpu.memory_space<vmem>>, %arg2: memref<8x1xf32, #tpu.memory_space<vmem>>, %arg3: memref<3x256xf32, #tpu.memory_space<vmem>>, %arg4: memref<8x256xf32, #tpu.memory_space<vmem>>, %arg5: memref<8x256xf32, #tpu.memory_space<vmem>>) attributes {dimension_semantics = [#tpu.dimension_semantics<parallel>], iteration_bounds = array<i64: 2>, scalar_prefetch = 0 : i64, scratch_operands = 0 : i64, tpu.core_type = #tpu.core_type<tc>, window_params = [{pipeline_mode = #tpu.pipeline_mode<synchronous>, transform_indices = @transform_0, window_bounds = array<i64: 8, 3>}, {pipeline_mode = #tpu.pipeline_mode<synchronous>, transform_indices = @transform_1, window_bounds = array<i64: 8, 1>}, {transform_indices = @transform_2, window_bounds = array<i64: 3, 256>}, {transform_indices = @transform_3, window_bounds = array<i64: 8, 256>}, {transform_indices = @transform_4, window_bounds = array<i64: 8, 256>}]} {
    %c0 = arith.constant 0 : index
    %c0_0 = arith.constant 0 : index
    %0 = vector.load %arg1[%c0, %c0_0] : memref<8x3xf32, #tpu.memory_space<vmem>>, vector<8x3xf32>
    %c0_1 = arith.constant 0 : index
    %c0_2 = arith.constant 0 : index
    %1 = vector.load %arg3[%c0_1, %c0_2] : memref<3x256xf32, #tpu.memory_space<vmem>>, vector<3x256xf32>
    %c0_3 = arith.constant 0 : index
    %c0_4 = arith.constant 0 : index
    %2 = vector.load %arg4[%c0_3, %c0_4] : memref<8x256xf32, #tpu.memory_space<vmem>>, vector<8x256xf32>
    %c0_5 = arith.constant 0 : index
    %c0_6 = arith.constant 0 : index
    %3 = vector.load %arg2[%c0_5, %c0_6] : memref<8x1xf32, #tpu.memory_space<vmem>>, vector<8x1xf32>
    %4 = vector.broadcast %3 : vector<8x1xf32> to vector<8x256xf32>
    %5 = arith.addf %2, %4 : vector<8x256xf32>
    %6 = vector.extract_strided_slice %0 {offsets = [0, 0], sizes = [8, 1], strides = [1, 1]} : vector<8x3xf32> to vector<8x1xf32>
    %7 = vector.extract_strided_slice %0 {offsets = [0, 1], sizes = [8, 1], strides = [1, 1]} : vector<8x3xf32> to vector<8x1xf32>
    %8 = vector.extract_strided_slice %0 {offsets = [0, 2], sizes = [8, 1], strides = [1, 1]} : vector<8x3xf32> to vector<8x1xf32>
    %9 = vector.extract_strided_slice %1 {offsets = [0, 0], sizes = [1, 256], strides = [1, 1]} : vector<3x256xf32> to vector<1x256xf32>
    %10 = vector.broadcast %6 : vector<8x1xf32> to vector<8x256xf32>
    %11 = vector.broadcast %9 : vector<1x256xf32> to vector<8x256xf32>
    %12 = arith.mulf %10, %11 : vector<8x256xf32>
    %13 = arith.addf %5, %12 : vector<8x256xf32>
    %14 = vector.extract_strided_slice %1 {offsets = [1, 0], sizes = [1, 256], strides = [1, 1]} : vector<3x256xf32> to vector<1x256xf32>
    %15 = vector.broadcast %7 : vector<8x1xf32> to vector<8x256xf32>
    %16 = vector.broadcast %14 : vector<1x256xf32> to vector<8x256xf32>
    %17 = arith.mulf %15, %16 : vector<8x256xf32>
    %18 = arith.addf %13, %17 : vector<8x256xf32>
    %19 = vector.extract_strided_slice %1 {offsets = [2, 0], sizes = [1, 256], strides = [1, 1]} : vector<3x256xf32> to vector<1x256xf32>
    %20 = vector.broadcast %8 : vector<8x1xf32> to vector<8x256xf32>
    %21 = vector.broadcast %19 : vector<1x256xf32> to vector<8x256xf32>
    %22 = arith.mulf %20, %21 : vector<8x256xf32>
    %23 = arith.addf %18, %22 : vector<8x256xf32>
    %c0_7 = arith.constant 0 : index
    %c0_8 = arith.constant 0 : index
    %24 = vector.load %arg5[%c0_7, %c0_8] : memref<8x256xf32, #tpu.memory_space<vmem>>, vector<8x256xf32>
    tpu.vector_store %arg5[%c0_7, %c0_8], %23 {strides = array<i32>} : memref<8x256xf32, #tpu.memory_space<vmem>>, vector<8x256xf32>,
    return
  }
  func.func @transform_0(%arg0: i32) -> (i32, i32) {
    %c0_i32 = arith.constant 0 : i32
    %c0_i32_0 = arith.constant 0 : i32
    %c0_i32_1 = arith.constant 0 : i32
    return %c0_i32, %c0_i32_0 : i32, i32
  }
  func.func @transform_1(%arg0: i32) -> (i32, i32) {
    %c0_i32 = arith.constant 0 : i32
    %c0_i32_0 = arith.constant 0 : i32
    %c0_i32_1 = arith.constant 0 : i32
    return %c0_i32, %c0_i32_0 : i32, i32
  }
  func.func @transform_2(%arg0: i32) -> (i32, i32) {
    %c0_i32 = arith.constant 0 : i32
    %c0_i32_0 = arith.constant 0 : i32
    return %c0_i32, %arg0 : i32, i32
  }
  func.func @transform_3(%arg0: i32) -> (i32, i32) {
    %c0_i32 = arith.constant 0 : i32
    %c0_i32_0 = arith.constant 0 : i32
    return %c0_i32, %arg0 : i32, i32
  }
  func.func @transform_4(%arg0: i32) -> (i32, i32) {
    %c0_i32 = arith.constant 0 : i32
    %c0_i32_0 = arith.constant 0 : i32
    return %c0_i32, %arg0 : i32, i32
  }
}

</mosaic_0001>

<llo_original>
// kernel: conv1x1_pad1_add.1
$region0: #{conv1x1_pad1_add.1}
  #allocation0 [shape = 'u32[]', space=smem, size = 0x4, offset = 0x4, fixed_abs, tag = 'smem constant byte address 0x4 - core index']
  #allocation1 [shape = 'u32[72,128]{1,0:T(1,128)}', space=vmem, size = 0x9000, scoped, tag = 'internal scratch']
  %s0 = inlined_call_operand.vmem [shape: f32[8,3], index: 0, kind: input, shape index: {}]
  %s1 = inlined_call_operand.vmem [shape: f32[8,1], index: 1, kind: input, shape index: {}]
  %s2 = inlined_call_operand.vmem [shape: f32[3,324], index: 2, kind: input, shape index: {}]
  %s3 = inlined_call_operand.vmem [shape: f32[8,324], index: 3, kind: input, shape index: {}]
  %s4 = inlined_call_operand.vmem [shape: f32[8,324], index: 4, kind: output, shape index: {}]
  %s5 = sld [smem:[#allocation0]]
  $region111: #{conv1x1_pad1_add.1} parent=0
    _
  %s7 = ssub.s32 1, %s5
  %s8 = scalar_select 0, %s7, %s5
  $region1: #{conv1x1_pad1_add.1} parent=0
    #allocation2 [shape = 'u8[16384]{0}', space=vmem, size = 0x4000, scoped, tag = 'output window, operand 0']
    loop: start=0, step=1, limit=4
    $region2: #{conv1x1_pad1_add.1} parent=1 // loop_pre_header
      _
    $region3: #{conv1x1_pad1_add.1} parent=1 // loop_header
      %s10 = sphi 0, %s14
      %p11 = scmp.ge.s32.totalorder %s10, 4
      %s18 = sphi 0, %s18
      %s20 = sphi 0, %s18
      %s21 = sphi 0, %s20
      %s35 = sphi 0, %s21
      %s39 = sphi 0, %s39
      %s41 = sphi 0, %s39
      %s42 = sphi 0, %s41
      %s56 = sphi 0, %s42
      %s62 = sphi 0, %s64
      %s65 = sphi 0, %s62
      %s66 = sphi 0, %s65
      %s82 = sphi 0, %s66
      %s88 = sphi 0, %s90
      %s91 = sphi 0, %s88
      %s92 = sphi 0, %s91
      %s108 = sphi 0, %s92
      %s114 = sphi 0, %s116
      %s117 = sphi 0, %s114
      %s118 = sphi 0, %s117
      %s134 = sphi 0, %s118
    $region4: #{conv1x1_pad1_add.1} parent=1 // loop_header_branch
      %13 = sbr.rel (%p11) target = $region8
    $region5: #{conv1x1_pad1_add.1} parent=1 // loop_body
      %s15 = ssub.s32 %s10, 1
      %s16 = ssub.s32 %s10, 2
      %s17 = sadd.s32 %s10, 1
      %s19 = sadd.s32 %s18, 1
      %p22 = scmp.eq.s32.totalorder %s10, 1
      %p23 = scmp.ne.s32.totalorder %s18, %s20
      %p24 = scmp.eq.s32.totalorder %s10, 0
      %p25 = por %p23, %p24
      %p26 = scmp.ne.s32.totalorder %s18, %s20
      %p27 = scmp.eq.s32.totalorder %s15, 1
      %p28 = por %p26, %p27
      %p29 = scmp.ne.s32.totalorder %s20, %s21
      %p30 = scmp.eq.s32.totalorder %s15, 0
      %p31 = por %p29, %p30
      %p32 = scmp.ne.s32.totalorder %s20, %s21
      %p33 = scmp.eq.s32.totalorder %s16, 1
      %p34 = por %p32, %p33
      %p36 = scmp.ne.s32.totalorder %s21, %s35
      %p37 = scmp.eq.s32.totalorder %s16, 0
      %p38 = por %p36, %p37
      %s40 = sadd.s32 %s39, 1
      %p43 = scmp.eq.s32.totalorder %s10, 1
      %p44 = scmp.ne.s32.totalorder %s39, %s41
      %p45 = scmp.eq.s32.totalorder %s10, 0
      %p46 = por %p44, %p45
      %p47 = scmp.ne.s32.totalorder %s39, %s41
      %p48 = scmp.eq.s32.totalorder %s15, 1
      %p49 = por %p47, %p48
      %p50 = scmp.ne.s32.totalorder %s41, %s42
      %p51 = scmp.eq.s32.totalorder %s15, 0
      %p52 = por %p50, %p51
      %p53 = scmp.ne.s32.totalorder %s41, %s42
      %p54 = scmp.eq.s32.totalorder %s16, 1
      %p55 = por %p53, %p54
      %p57 = scmp.ne.s32.totalorder %s42, %s56
      %p58 = scmp.eq.s32.totalorder %s16, 0
      %p59 = por %p57, %p58
      %s60 = ssub.s32 %s10, %s17
      %p61 = scmp.eq.s32.totalorder %s60, 0
      %s63 = sadd.s32 %s62, 1
      %s64 = scalar_select %p61, %s62, %s63
      %p67 = pneg %p61
      %p68 = scmp.eq.s32.totalorder %s10, 1
      %p69 = por %p67, %p68
      %p70 = scmp.ne.s32.totalorder %s62, %s65
      %p71 = scmp.eq.s32.totalorder %s10, 0
      %p72 = por %p70, %p71
      %p73 = scmp.ne.s32.totalorder %s62, %s65
      %p74 = scmp.eq.s32.totalorder %s15, 1
      %p75 = por %p73, %p74
      %p76 = scmp.ne.s32.totalorder %s65, %s66
      %p77 = scmp.eq.s32.totalorder %s15, 0
      %p78 = por %p76, %p77
      %p79 = scmp.ne.s32.totalorder %s65, %s66
      %p80 = scmp.eq.s32.totalorder %s16, 1
      %p81 = por %p79, %p80
      %p83 = scmp.ne.s32.totalorder %s66, %s82
      %p84 = scmp.eq.s32.totalorder %s16, 0
      %p85 = por %p83, %p84
      %s86 = ssub.s32 %s10, %s17
      %p87 = scmp.eq.s32.totalorder %s86, 0
      %s89 = sadd.s32 %s88, 1
      %s90 = scalar_select %p87, %s88, %s89
      %p93 = pneg %p87
      %p94 = scmp.eq.s32.totalorder %s10, 1
      %p95 = por %p93, %p94
      %p96 = scmp.ne.s32.totalorder %s88, %s91
      %p97 = scmp.eq.s32.totalorder %s10, 0
      %p98 = por %p96, %p97
      %p99 = scmp.ne.s32.totalorder %s88, %s91
      %p100 = scmp.eq.s32.totalorder %s15, 1
      %p101 = por %p99, %p100
      %p102 = scmp.ne.s32.totalorder %s91, %s92
      %p103 = scmp.eq.s32.totalorder %s15, 0
      %p104 = por %p102, %p103
      %p105 = scmp.ne.s32.totalorder %s91, %s92
      %p106 = scmp.eq.s32.totalorder %s16, 1
      %p107 = por %p105, %p106
      %p109 = scmp.ne.s32.totalorder %s92, %s108
      %p110 = scmp.eq.s32.totalorder %s16, 0
      %p111 = por %p109, %p110
      %s112 = ssub.s32 %s10, %s17
      %p113 = scmp.eq.s32.totalorder %s112, 0
      %s115 = sadd.s32 %s114, 1
      %s116 = scalar_select %p113, %s114, %s115
      %p119 = pneg %p113
      %p120 = scmp.eq.s32.totalorder %s10, 1
      %p121 = por %p119, %p120
      %p122 = scmp.ne.s32.totalorder %s114, %s117
      %p123 = scmp.eq.s32.totalorder %s10, 0
      %p124 = por %p122, %p123
      %p125 = scmp.ne.s32.totalorder %s114, %s117
      %p126 = scmp.eq.s32.totalorder %s15, 1
      %p127 = por %p125, %p126
      %p128 = scmp.ne.s32.totalorder %s117, %s118
      %p129 = scmp.eq.s32.totalorder %s15, 0
      %p130 = por %p128, %p129
      %p131 = scmp.ne.s32.totalorder %s117, %s118
      %p132 = scmp.eq.s32.totalorder %s16, 1
      %p133 = por %p131, %p132
      %p135 = scmp.ne.s32.totalorder %s118, %s134
      %p136 = scmp.eq.s32.totalorder %s16, 0
      %p137 = por %p135, %p136
      %p138 = scmp.le.s32.totalorder 1, %s10
      %p139 = scmp.lt.s32.totalorder %s10, 3
      %p140 = pnand %p138, %p139
      %p141 = pneg %p140
      // Predicated region
      $region9: #{conv1x1_pad1_add.1} parent=5 // pred_check
        _
      $region10: #{conv1x1_pad1_add.1} parent=5 // pred_check_branch
        %143 = sbr.rel (%p140) target = $region12
      $region11: #{conv1x1_pad1_add.1} parent=5 // pred_region
        %s144 = ssub.s32 %s10, 1
        // Predicated region
        $region13: #{conv1x1_pad1_add.1} parent=11 // pred_check
          %p145 = pneg %p31
        $region14: #{conv1x1_pad1_add.1} parent=11 // pred_check_branch
          %147 = sbr.rel (%p145) target = $region16
        $region15: #{conv1x1_pad1_add.1} parent=11 // pred_region
          _
        $region16: #{conv1x1_pad1_add.1} parent=11 // pred_fallthru
          _
        // Predicated region
        $region17: #{conv1x1_pad1_add.1} parent=11 // pred_check
          %p148 = pneg %p52
        $region18: #{conv1x1_pad1_add.1} parent=11 // pred_check_branch
          %150 = sbr.rel (%p148) target = $region20
        $region19: #{conv1x1_pad1_add.1} parent=11 // pred_region
          _
        $region20: #{conv1x1_pad1_add.1} parent=11 // pred_fallthru
          _
      $region12: #{conv1x1_pad1_add.1} parent=5 // pred_fallthru
        _
      %p151 = scmp.lt.s32.totalorder %s10, 2
      // Predicated region
      $region21: #{conv1x1_pad1_add.1} parent=5 // pred_check
        %p152 = pneg %p151
      $region22: #{conv1x1_pad1_add.1} parent=5 // pred_check_branch
        %154 = sbr.rel (%p152) target = $region24
      $region23: #{conv1x1_pad1_add.1} parent=5 // pred_region
        // Predicated region
        $region25: #{conv1x1_pad1_add.1} parent=23 // pred_check
          %p155 = pneg %p72
        $region26: #{conv1x1_pad1_add.1} parent=23 // pred_check_branch
          %157 = sbr.rel (%p155) target = $region28
        $region27: #{conv1x1_pad1_add.1} parent=23 // pred_region
          %s158 = smul.u32 2, %s10
          %s159 = ssub.s32 3, %s158
          %p160 = scmp.lt.s32.totalorder %s159, 2
          %s161 = scalar_select %p160, %s159, 2
          %s162 = smul.u32 4, %s161
          %p163 = scmp.lt.s32.totalorder %s158, 2
          %s164 = scalar_select %p163, %s158, 2
          %s165 = smul.addr %s164, 4
          %s166 = scalar_lea.vmem %s2, %s165
          %s167 = smul.u32 2, %s10
          %s168 = ssub.s32 3, %s167
          %p169 = scmp.lt.s32.totalorder %s168, 2
          %s170 = scalar_select %p169, %s168, 2
          %s171 = smul.u32 4, %s170
        $region28: #{conv1x1_pad1_add.1} parent=23 // pred_fallthru
          _
        // Predicated region
        $region29: #{conv1x1_pad1_add.1} parent=23 // pred_check
          %p172 = pneg %p98
        $region30: #{conv1x1_pad1_add.1} parent=23 // pred_check_branch
          %174 = sbr.rel (%p172) target = $region32
        $region31: #{conv1x1_pad1_add.1} parent=23 // pred_region
          %s175 = smul.u32 2, %s10
          %s176 = ssub.s32 3, %s175
          %p177 = scmp.lt.s32.totalorder %s176, 2
          %s178 = scalar_select %p177, %s176, 2
          %s179 = smul.u32 8, %s178
          %p180 = scmp.lt.s32.totalorder %s175, 2
          %s181 = scalar_select %p180, %s175, 2
          %s182 = smul.addr %s181, 8
          %s183 = scalar_lea.vmem %s3, %s182
          %s184 = smul.u32 2, %s10
          %s185 = ssub.s32 3, %s184
          %p186 = scmp.lt.s32.totalorder %s185, 2
          %s187 = scalar_select %p186, %s185, 2
          %s188 = smul.u32 8, %s187
        $region32: #{conv1x1_pad1_add.1} parent=23 // pred_fallthru
          _
      $region24: #{conv1x1_pad1_add.1} parent=5 // pred_fallthru
        _
      %p189 = scmp.le.s32.totalorder 1, %s10
      %p190 = scmp.lt.s32.totalorder %s10, 3
      %p191 = pnand %p189, %p190
      %p192 = pneg %p191
      // Predicated region
      $region33: #{conv1x1_pad1_add.1} parent=5 // pred_check
        _
      $region34: #{conv1x1_pad1_add.1} parent=5 // pred_check_branch
        %194 = sbr.rel (%p191) target = $region36
      $region35: #{conv1x1_pad1_add.1} parent=5 // pred_region
        %s195 = ssub.s32 %s10, 1
        %p196 = pneg %p31
        %p197 = pneg %p28
        %p198 = pneg %p52
        %p199 = pneg %p49
        %s200 = smul.u32 2, %s15
        %s201 = ssub.s32 3, %s200
        %p202 = scmp.lt.s32.totalorder %s201, 2
        %s203 = scalar_select %p202, %s201, 2
        %s204 = smul.u32 4, %s203
        %p205 = scmp.lt.s32.totalorder %s200, 2
        %s206 = scalar_select %p205, %s200, 2
        %s207 = smul.addr %s206, 4
        %s208 = scalar_lea.vmem %s2, %s207
        %p209 = pneg %p78
        %p210 = pneg %p75
        %s211 = smul.u32 2, %s15
        %s212 = ssub.s32 3, %s211
        %p213 = scmp.lt.s32.totalorder %s212, 2
        %s214 = scalar_select %p213, %s212, 2
        %s215 = smul.u32 8, %s214
        %p216 = scmp.lt.s32.totalorder %s211, 2
        %s217 = scalar_select %p216, %s211, 2
        %s218 = smul.addr %s217, 8
        %s219 = scalar_lea.vmem %s3, %s218
        %p220 = pneg %p104
        %p221 = pneg %p101
        %p222 = pneg %p130
        %p223 = pneg %p127
        %s224 = sand.u32 %s117, 1
        %s225 = sand.u32 %s117, 1
        %s226 = smul.addr %s225, 16
        %s227 = scalar_lea.vmem [#allocation2], %s226
        %s228 = smul.u32 2, %s15
        %s229 = ssub.s32 3, %s228
        %p230 = scmp.lt.s32.totalorder %s229, 2
        %s231 = scalar_select %p230, %s229, 2
        %s232 = smul.u32 4, %s231
        %p233 = scmp.lt.s32.totalorder %s228, 2
        %s234 = scalar_select %p233, %s228, 2
        %s235 = smul.addr %s234, 4
        %s236 = scalar_lea.vmem %s2, %s235
        %s237 = smul.u32 2, %s15
        %s238 = ssub.s32 3, %s237
        %p239 = scmp.lt.s32.totalorder %s238, 2
        %s240 = scalar_select %p239, %s238, 2
        %s241 = smul.u32 4, %s240
        %s242 = smul.u32 2, %s15
        %s243 = ssub.s32 3, %s242
        %p244 = scmp.lt.s32.totalorder %s243, 2
        %s245 = scalar_select %p244, %s243, 2
        %s246 = smul.u32 8, %s245
        %p247 = scmp.lt.s32.totalorder %s242, 2
        %s248 = scalar_select %p247, %s242, 2
        %s249 = smul.addr %s248, 8
        %s250 = scalar_lea.vmem %s3, %s249
        %s251 = smul.u32 2, %s15
        %s252 = ssub.s32 3, %s251
        %p253 = scmp.lt.s32.totalorder %s252, 2
        %s254 = scalar_select %p253, %s252, 2
        %s255 = smul.u32 8, %s254
        %s256 = smul.u32 2, %s15
        %s257 = ssub.s32 3, %s256
        %p258 = scmp.lt.s32.totalorder %s257, 2
        %s259 = scalar_select %p258, %s257, 2
        %s260 = smul.u32 8, %s259
        %v261 = vld [vmem:[%s0] sm:$0xff]
        %v262 = vld [vmem:[%s236] sm:$0x77]
        %v263 = vld [vmem:[%s250] sm:$0xff]
        %v264 = vld [vmem:[%s250 + $0x8] sm:$0xff]
        %v265 = vld [vmem:[%s1] sm:$0xff]
        %267 = vset.pattern.permute.xlu0 0
        %268 = vperm.xlu0 %267, %v265
        %v269 = vpop.permute.xlu0 %268
        %v271 = vadd.f32 %v263, %v269
        %v272 = vadd.f32 %v264, %v269
        %274 = vset.pattern.permute.xlu0 0
        %275 = vperm.xlu0 %274, %v261
        %v276 = vpop.permute.xlu0 %275
        %v279 = vperm.slane %v262, 0
        %v280 = vperm.slane %v262, 4
        %v283 = vperm.slane %v279, 0
        %v284 = vperm.slane %v280, 0
        %v285 = vmul.f32 %v276, %v283
        %v286 = vmul.f32 %v276, %v284
        %v287 = vadd.f32 %v271, %v285
        %v288 = vadd.f32 %v272, %v286
        %289 = vset.pattern.permute.xlu0 1
        %290 = vperm.xlu0 %289, %v261
        %v291 = vpop.permute.xlu0 %290
        %v293 = vperm.slane %v262, 1
        %v294 = vperm.slane %v262, 5
        %v297 = vperm.slane %v293, 1
        %v298 = vperm.slane %v294, 1
        %v299 = vmul.f32 %v291, %v297
        %v300 = vmul.f32 %v291, %v298
        %v301 = vadd.f32 %v287, %v299
        %v302 = vadd.f32 %v288, %v300
        %303 = vset.pattern.permute.xlu0 2
        %304 = vperm.xlu0 %303, %v261
        %v305 = vpop.permute.xlu0 %304
        %v307 = vperm.slane %v262, 2
        %v308 = vperm.slane %v262, 6
        %v311 = vperm.slane %v307, 2
        %v312 = vperm.slane %v308, 2
        %v313 = vmul.f32 %v305, %v311
        %v314 = vmul.f32 %v305, %v312
        %v315 = vadd.f32 %v301, %v313
        %v316 = vadd.f32 %v302, %v314
        %317 = vst [vmem:[%s227] sm:$0xff] %v315
        %318 = vst [vmem:[%s227 + $0x8] sm:$0xff] %v316
        %s319 = sand.u32 %s117, 1
        %s320 = sand.u32 %s117, 1
        %s321 = smul.addr %s320, 16
        %s322 = scalar_lea.vmem [#allocation2], %s321
        // Predicated region
        $region37: #{conv1x1_pad1_add.1} parent=35 // pred_check
          %p323 = pneg %p127
        $region38: #{conv1x1_pad1_add.1} parent=35 // pred_check_branch
          %325 = sbr.rel (%p323) target = $region40
        $region39: #{conv1x1_pad1_add.1} parent=35 // pred_region
          %s326 = smul.u32 2, %s15
          %s327 = ssub.s32 3, %s326
          %p328 = scmp.lt.s32.totalorder %s327, 2
          %s329 = scalar_select %p328, %s327, 2
          %s330 = smul.u32 8, %s329
          %p331 = scmp.ne.s32.totalorder 0, %s330
          %s332 = smul.addr %s326, 8
          %s333 = scalar_lea.vmem %s4, %s332
          %s334 = smul.u32 %s329, 8
          // Predicated region
          $region41: #{conv1x1_pad1_add.1} parent=39 // pred_check
            %p335 = pneg %p331
          $region42: #{conv1x1_pad1_add.1} parent=39 // pred_check_branch
            %337 = sbr.rel (%p335) target = $region44
          $region43: #{conv1x1_pad1_add.1} parent=39 // pred_region
            %p338 = scmp.lt.u32.totalorder %s334, 8
            %p339 = pneg %p338
            // Predicated region
            $region45: #{conv1x1_pad1_add.1} parent=43 // pred_check
              _
            $region46: #{conv1x1_pad1_add.1} parent=43 // pred_check_branch
              %341 = sbr.rel (%p338) target = $region48
            $region47: #{conv1x1_pad1_add.1} parent=43 // pred_region
              %s357 = sand.u32 %s334, 7
              %p358 = scmp.eq.s32.totalorder %s357, 0
              // Predicated region
              $region60: #{conv1x1_pad1_add.1} parent=47 // pred_check
                %p359 = pneg %p358
              $region61: #{conv1x1_pad1_add.1} parent=47 // pred_check_branch
                %361 = sbr.rel (%p359) target = $region63
              $region62: #{conv1x1_pad1_add.1} parent=47 // pred_region
                %s362 = sshrl.u32 %s334, 3
                %s363 = sshrl.u32 %s362, 5
                // While loop
                $region64: #{conv1x1_pad1_add.1} parent=62 // loop_pre_header
                  _
                $region65: #{conv1x1_pad1_add.1} parent=62 // loop_header
                  %s365 = sphi 0, %s367
                  %p366 = scmp.ge.s32.totalorder %s365, %s363
                  %s370 = sphi 0, %s439
                  %s371 = sphi %s322, %s442
                  %s372 = sphi %s333, %s443
                $region66: #{conv1x1_pad1_add.1} parent=62 // loop_header_branch
                  %369 = sbr.rel (%p366) target = $region70
                $region67: #{conv1x1_pad1_add.1} parent=62 // loop_body
                  %v373 = vld [vmem:[%s371] sm:$0xff]
                  %374 = vst [vmem:[%s372] sm:$0xff] %v373
                  %v375 = vld [vmem:[%s371 + $0x8] sm:$0xff]
                  %376 = vst [vmem:[%s372 + $0x8] sm:$0xff] %v375
                  %v377 = vld [vmem:[%s371 + $0x10] sm:$0xff]
                  %378 = vst [vmem:[%s372 + $0x10] sm:$0xff] %v377
                  %v379 = vld [vmem:[%s371 + $0x18] sm:$0xff]
                  %380 = vst [vmem:[%s372 + $0x18] sm:$0xff] %v379
                  %v381 = vld [vmem:[%s371 + $0x20] sm:$0xff]
                  %382 = vst [vmem:[%s372 + $0x20] sm:$0xff] %v381
                  %v383 = vld [vmem:[%s371 + $0x28] sm:$0xff]
                  %384 = vst [vmem:[%s372 + $0x28] sm:$0xff] %v383
                  %v385 = vld [vmem:[%s371 + $0x30] sm:$0xff]
                  %386 = vst [vmem:[%s372 + $0x30] sm:$0xff] %v385
                  %v387 = vld [vmem:[%s371 + $0x38] sm:$0xff]
                  %388 = vst [vmem:[%s372 + $0x38] sm:$0xff] %v387
                  %v389 = vld [vmem:[%s371 + $0x40] sm:$0xff]
                  %390 = vst [vmem:[%s372 + $0x40] sm:$0xff] %v389
                  %v391 = vld [vmem:[%s371 + $0x48] sm:$0xff]
                  %392 = vst [vmem:[%s372 + $0x48] sm:$0xff] %v391
                  %v393 = vld [vmem:[%s371 + $0x50] sm:$0xff]
                  %394 = vst [vmem:[%s372 + $0x50] sm:$0xff] %v393
                  %v395 = vld [vmem:[%s371 + $0x58] sm:$0xff]
                  %396 = vst [vmem:[%s372 + $0x58] sm:$0xff] %v395
                  %v397 = vld [vmem:[%s371 + $0x60] sm:$0xff]
                  %398 = vst [vmem:[%s372 + $0x60] sm:$0xff] %v397
                  %v399 = vld [vmem:[%s371 + $0x68] sm:$0xff]
                  %400 = vst [vmem:[%s372 + $0x68] sm:$0xff] %v399
                  %v401 = vld [vmem:[%s371 + $0x70] sm:$0xff]
                  %402 = vst [vmem:[%s372 + $0x70] sm:$0xff] %v401
                  %v403 = vld [vmem:[%s371 + $0x78] sm:$0xff]
                  %404 = vst [vmem:[%s372 + $0x78] sm:$0xff] %v403
                  %v405 = vld [vmem:[%s371 + $0x80] sm:$0xff]
                  %406 = vst [vmem:[%s372 + $0x80] sm:$0xff] %v405
                  %v407 = vld [vmem:[%s371 + $0x88] sm:$0xff]
                  %408 = vst [vmem:[%s372 + $0x88] sm:$0xff] %v407
                  %v409 = vld [vmem:[%s371 + $0x90] sm:$0xff]
                  %410 = vst [vmem:[%s372 + $0x90] sm:$0xff] %v409
                  %v411 = vld [vmem:[%s371 + $0x98] sm:$0xff]
                  %412 = vst [vmem:[%s372 + $0x98] sm:$0xff] %v411
                  %v413 = vld [vmem:[%s371 + $0xa0] sm:$0xff]
                  %414 = vst [vmem:[%s372 + $0xa0] sm:$0xff] %v413
                  %v415 = vld [vmem:[%s371 + $0xa8] sm:$0xff]
                  %416 = vst [vmem:[%s372 + $0xa8] sm:$0xff] %v415
                  %v417 = vld [vmem:[%s371 + $0xb0] sm:$0xff]
                  %418 = vst [vmem:[%s372 + $0xb0] sm:$0xff] %v417
                  %v419 = vld [vmem:[%s371 + $0xb8] sm:$0xff]
                  %420 = vst [vmem:[%s372 + $0xb8] sm:$0xff] %v419
                  %v421 = vld [vmem:[%s371 + $0xc0] sm:$0xff]
                  %422 = vst [vmem:[%s372 + $0xc0] sm:$0xff] %v421
                  %v423 = vld [vmem:[%s371 + $0xc8] sm:$0xff]
                  %424 = vst [vmem:[%s372 + $0xc8] sm:$0xff] %v423
                  %v425 = vld [vmem:[%s371 + $0xd0] sm:$0xff]
                  %426 = vst [vmem:[%s372 + $0xd0] sm:$0xff] %v425
                  %v427 = vld [vmem:[%s371 + $0xd8] sm:$0xff]
                  %428 = vst [vmem:[%s372 + $0xd8] sm:$0xff] %v427
                  %v429 = vld [vmem:[%s371 + $0xe0] sm:$0xff]
                  %430 = vst [vmem:[%s372 + $0xe0] sm:$0xff] %v429
                  %v431 = vld [vmem:[%s371 + $0xe8] sm:$0xff]
                  %432 = vst [vmem:[%s372 + $0xe8] sm:$0xff] %v431
                  %v433 = vld [vmem:[%s371 + $0xf0] sm:$0xff]
                  %434 = vst [vmem:[%s372 + $0xf0] sm:$0xff] %v433
                  %v435 = vld [vmem:[%s371 + $0xf8] sm:$0xff]
                  %436 = vst [vmem:[%s372 + $0xf8] sm:$0xff] %v435
                  %s437 = sadd.s32 1, %s370
                  %p438 = scmp.ge.s32.totalorder %s437, %s363
                  %s439 = scalar_select %p438, 0, %s437
                  %s440 = smul.u32 %s439, 256
                  %s441 = smul.u32 %s439, 256
                  %s442 = scalar_lea.vmem %s322, %s440 [#allocation2]
                  %s443 = scalar_lea.vmem %s333, %s441
                $region68: #{conv1x1_pad1_add.1} parent=62 // loop_footer
                  %s367 = sadd.s32 %s365, 1
                $region69: #{conv1x1_pad1_add.1} parent=62 // loop_footer_branch
                  %364 = sbr.rel target = $region65
                $region70: #{conv1x1_pad1_add.1} parent=62 // loop_exit
                  _
                %s444 = sshrl.u32 %s362, 5
                %s445 = sand.u32 %s362, 31
                %s446 = smul.u32 %s444, 32
                %s447 = smul.u32 8, %s446
                %s448 = scalar_lea.vmem %s322, %s447 [#allocation2]
                %s449 = smul.u32 8, %s446
                %s450 = scalar_lea.vmem %s333, %s449
                // While loop
                $region71: #{conv1x1_pad1_add.1} parent=62 // loop_pre_header
                  _
                $region72: #{conv1x1_pad1_add.1} parent=62 // loop_header
                  %s452 = sphi 0, %s454
                  %p453 = scmp.ge.s32.totalorder %s452, %s445
                  %s457 = sphi 0, %s464
                  %s458 = sphi %s448, %s467
                  %s459 = sphi %s450, %s468
                $region73: #{conv1x1_pad1_add.1} parent=62 // loop_header_branch
                  %456 = sbr.rel (%p453) target = $region77
                $region74: #{conv1x1_pad1_add.1} parent=62 // loop_body
                  %v460 = vld [vmem:[%s458] sm:$0xff]
                  %461 = vst [vmem:[%s459] sm:$0xff] %v460
                  %s462 = sadd.s32 1, %s457
                  %p463 = scmp.ge.s32.totalorder %s462, %s445
                  %s464 = scalar_select %p463, 0, %s462
                  %s465 = smul.u32 %s464, 8
                  %s466 = smul.u32 %s464, 8
                  %s467 = scalar_lea.vmem %s448, %s465 [#allocation2]
                  %s468 = scalar_lea.vmem %s450, %s466
                $region75: #{conv1x1_pad1_add.1} parent=62 // loop_footer
                  %s454 = sadd.s32 %s452, 1
                $region76: #{conv1x1_pad1_add.1} parent=62 // loop_footer_branch
                  %451 = sbr.rel target = $region72
                $region77: #{conv1x1_pad1_add.1} parent=62 // loop_exit
                  _
              $region63: #{conv1x1_pad1_add.1} parent=47 // pred_fallthru
                _
              %p469 = pneg %p358
              // Predicated region
              $region78: #{conv1x1_pad1_add.1} parent=47 // pred_check
                _
              $region79: #{conv1x1_pad1_add.1} parent=47 // pred_check_branch
                %471 = sbr.rel (%p358) target = $region81
              $region80: #{conv1x1_pad1_add.1} parent=47 // pred_region
                %s472 = sand.u32 %s334, 7
                %s473 = ssub.s32 %s334, %s472
                %s474 = scalar_lea.vmem %s322, %s473 [#allocation2]
                %s475 = ssub.s32 %s334, %s472
                %s476 = scalar_lea.vmem %s333, %s475
                %s477 = sshrl.u32 %s334, 3
                %s478 = sshrl.u32 %s477, 5
                // While loop
                $region82: #{conv1x1_pad1_add.1} parent=80 // loop_pre_header
                  _
                $region83: #{conv1x1_pad1_add.1} parent=80 // loop_header
                  %s480 = sphi 0, %s482
                  %p481 = scmp.ge.s32.totalorder %s480, %s478
                  %s485 = sphi 0, %s554
                  %s486 = sphi %s322, %s557
                  %s487 = sphi %s333, %s558
                $region84: #{conv1x1_pad1_add.1} parent=80 // loop_header_branch
                  %484 = sbr.rel (%p481) target = $region88
                $region85: #{conv1x1_pad1_add.1} parent=80 // loop_body
                  %v488 = vld [vmem:[%s486] sm:$0xff]
                  %489 = vst [vmem:[%s487] sm:$0xff] %v488
                  %v490 = vld [vmem:[%s486 + $0x8] sm:$0xff]
                  %491 = vst [vmem:[%s487 + $0x8] sm:$0xff] %v490
                  %v492 = vld [vmem:[%s486 + $0x10] sm:$0xff]
                  %493 = vst [vmem:[%s487 + $0x10] sm:$0xff] %v492
                  %v494 = vld [vmem:[%s486 + $0x18] sm:$0xff]
                  %495 = vst [vmem:[%s487 + $0x18] sm:$0xff] %v494
                  %v496 = vld [vmem:[%s486 + $0x20] sm:$0xff]
                  %497 = vst [vmem:[%s487 + $0x20] sm:$0xff] %v496
                  %v498 = vld [vmem:[%s486 + $0x28] sm:$0xff]
                  %499 = vst [vmem:[%s487 + $0x28] sm:$0xff] %v498
                  %v500 = vld [vmem:[%s486 + $0x30] sm:$0xff]
                  %501 = vst [vmem:[%s487 + $0x30] sm:$0xff] %v500
                  %v502 = vld [vmem:[%s486 + $0x38] sm:$0xff]
                  %503 = vst [vmem:[%s487 + $0x38] sm:$0xff] %v502
                  %v504 = vld [vmem:[%s486 + $0x40] sm:$0xff]
                  %505 = vst [vmem:[%s487 + $0x40] sm:$0xff] %v504
                  %v506 = vld [vmem:[%s486 + $0x48] sm:$0xff]
                  %507 = vst [vmem:[%s487 + $0x48] sm:$0xff] %v506
                  %v508 = vld [vmem:[%s486 + $0x50] sm:$0xff]
                  %509 = vst [vmem:[%s487 + $0x50] sm:$0xff] %v508
                  %v510 = vld [vmem:[%s486 + $0x58] sm:$0xff]
                  %511 = vst [vmem:[%s487 + $0x58] sm:$0xff] %v510
                  %v512 = vld [vmem:[%s486 + $0x60] sm:$0xff]
                  %513 = vst [vmem:[%s487 + $0x60] sm:$0xff] %v512
                  %v514 = vld [vmem:[%s486 + $0x68] sm:$0xff]
                  %515 = vst [vmem:[%s487 + $0x68] sm:$0xff] %v514
                  %v516 = vld [vmem:[%s486 + $0x70] sm:$0xff]
                  %517 = vst [vmem:[%s487 + $0x70] sm:$0xff] %v516
                  %v518 = vld [vmem:[%s486 + $0x78] sm:$0xff]
                  %519 = vst [vmem:[%s487 + $0x78] sm:$0xff] %v518
                  %v520 = vld [vmem:[%s486 + $0x80] sm:$0xff]
                  %521 = vst [vmem:[%s487 + $0x80] sm:$0xff] %v520
                  %v522 = vld [vmem:[%s486 + $0x88] sm:$0xff]
                  %523 = vst [vmem:[%s487 + $0x88] sm:$0xff] %v522
                  %v524 = vld [vmem:[%s486 + $0x90] sm:$0xff]
                  %525 = vst [vmem:[%s487 + $0x90] sm:$0xff] %v524
                  %v526 = vld [vmem:[%s486 + $0x98] sm:$0xff]
                  %527 = vst [vmem:[%s487 + $0x98] sm:$0xff] %v526
                  %v528 = vld [vmem:[%s486 + $0xa0] sm:$0xff]
                  %529 = vst [vmem:[%s487 + $0xa0] sm:$0xff] %v528
                  %v530 = vld [vmem:[%s486 + $0xa8] sm:$0xff]
                  %531 = vst [vmem:[%s487 + $0xa8] sm:$0xff] %v530
                  %v532 = vld [vmem:[%s486 + $0xb0] sm:$0xff]
                  %533 = vst [vmem:[%s487 + $0xb0] sm:$0xff] %v532
                  %v534 = vld [vmem:[%s486 + $0xb8] sm:$0xff]
                  %535 = vst [vmem:[%s487 + $0xb8] sm:$0xff] %v534
                  %v536 = vld [vmem:[%s486 + $0xc0] sm:$0xff]
                  %537 = vst [vmem:[%s487 + $0xc0] sm:$0xff] %v536
                  %v538 = vld [vmem:[%s486 + $0xc8] sm:$0xff]
                  %539 = vst [vmem:[%s487 + $0xc8] sm:$0xff] %v538
                  %v540 = vld [vmem:[%s486 + $0xd0] sm:$0xff]
                  %541 = vst [vmem:[%s487 + $0xd0] sm:$0xff] %v540
                  %v542 = vld [vmem:[%s486 + $0xd8] sm:$0xff]
                  %543 = vst [vmem:[%s487 + $0xd8] sm:$0xff] %v542
                  %v544 = vld [vmem:[%s486 + $0xe0] sm:$0xff]
                  %545 = vst [vmem:[%s487 + $0xe0] sm:$0xff] %v544
                  %v546 = vld [vmem:[%s486 + $0xe8] sm:$0xff]
                  %547 = vst [vmem:[%s487 + $0xe8] sm:$0xff] %v546
                  %v548 = vld [vmem:[%s486 + $0xf0] sm:$0xff]
                  %549 = vst [vmem:[%s487 + $0xf0] sm:$0xff] %v548
                  %v550 = vld [vmem:[%s486 + $0xf8] sm:$0xff]
                  %551 = vst [vmem:[%s487 + $0xf8] sm:$0xff] %v550
                  %s552 = sadd.s32 1, %s485
                  %p553 = scmp.ge.s32.totalorder %s552, %s478
                  %s554 = scalar_select %p553, 0, %s552
                  %s555 = smul.u32 %s554, 256
                  %s556 = smul.u32 %s554, 256
                  %s557 = scalar_lea.vmem %s322, %s555 [#allocation2]
                  %s558 = scalar_lea.vmem %s333, %s556
                $region86: #{conv1x1_pad1_add.1} parent=80 // loop_footer
                  %s482 = sadd.s32 %s480, 1
                $region87: #{conv1x1_pad1_add.1} parent=80 // loop_footer_branch
                  %479 = sbr.rel target = $region83
                $region88: #{conv1x1_pad1_add.1} parent=80 // loop_exit
                  _
                %s559 = sshrl.u32 %s477, 5
                %s560 = sand.u32 %s477, 31
                %s561 = smul.u32 %s559, 32
                %s562 = smul.u32 8, %s561
                %s563 = scalar_lea.vmem %s322, %s562 [#allocation2]
                %s564 = smul.u32 8, %s561
                %s565 = scalar_lea.vmem %s333, %s564
                // While loop
                $region89: #{conv1x1_pad1_add.1} parent=80 // loop_pre_header
                  _
                $region90: #{conv1x1_pad1_add.1} parent=80 // loop_header
                  %s567 = sphi 0, %s569
                  %p568 = scmp.ge.s32.totalorder %s567, %s560
                  %s572 = sphi 0, %s579
                  %s573 = sphi %s563, %s582
                  %s574 = sphi %s565, %s583
                $region91: #{conv1x1_pad1_add.1} parent=80 // loop_header_branch
                  %571 = sbr.rel (%p568) target = $region95
                $region92: #{conv1x1_pad1_add.1} parent=80 // loop_body
                  %v575 = vld [vmem:[%s573] sm:$0xff]
                  %576 = vst [vmem:[%s574] sm:$0xff] %v575
                  %s577 = sadd.s32 1, %s572
                  %p578 = scmp.ge.s32.totalorder %s577, %s560
                  %s579 = scalar_select %p578, 0, %s577
                  %s580 = smul.u32 %s579, 8
                  %s581 = smul.u32 %s579, 8
                  %s582 = scalar_lea.vmem %s563, %s580 [#allocation2]
                  %s583 = scalar_lea.vmem %s565, %s581
                $region93: #{conv1x1_pad1_add.1} parent=80 // loop_footer
                  %s569 = sadd.s32 %s567, 1
                $region94: #{conv1x1_pad1_add.1} parent=80 // loop_footer_branch
                  %566 = sbr.rel target = $region90
                $region95: #{conv1x1_pad1_add.1} parent=80 // loop_exit
                  _
                %s584 = sshll.u32 1, %s472
                %s585 = ssub.s32 %s584, 1
                loop: start=0, step=1, limit=1
                $region96: #{conv1x1_pad1_add.1} parent=80 // loop_pre_header
                  _
                $region97: #{conv1x1_pad1_add.1} parent=80 // loop_header
                  %s587 = sphi 0, %s591
                  %p588 = scmp.ge.s32.totalorder %s587, 1
                  %s592 = sphi %s474, %s474
                  %s593 = sphi %s476, %s476
                $region98: #{conv1x1_pad1_add.1} parent=80 // loop_header_branch
                  %590 = sbr.rel (%p588) target = $region102
                $region99: #{conv1x1_pad1_add.1} parent=80 // loop_body
                  %v594 = vld [vmem:[%s592] sm:%s585]
                  %595 = vst [vmem:[%s593] sm:%s585] %v594
                $region100: #{conv1x1_pad1_add.1} parent=80 // loop_footer
                  %s591 = sadd.s32 1, %s587
                $region101: #{conv1x1_pad1_add.1} parent=80 // loop_footer_branch
                  %586 = sbr.rel target = $region97
                $region102: #{conv1x1_pad1_add.1} parent=80 // loop_exit
                  _
              $region81: #{conv1x1_pad1_add.1} parent=47 // pred_fallthru
                _
            $region48: #{conv1x1_pad1_add.1} parent=43 // pred_fallthru
              _
            // Predicated region
            $region49: #{conv1x1_pad1_add.1} parent=43 // pred_check
              %p342 = pneg %p338
            $region50: #{conv1x1_pad1_add.1} parent=43 // pred_check_branch
              %344 = sbr.rel (%p342) target = $region52
            $region51: #{conv1x1_pad1_add.1} parent=43 // pred_region
              %s345 = sshll.u32 1, %s334
              %s346 = ssub.s32 %s345, 1
              loop: start=0, step=1, limit=1
              $region53: #{conv1x1_pad1_add.1} parent=51 // loop_pre_header
                _
              $region54: #{conv1x1_pad1_add.1} parent=51 // loop_header
                %s348 = sphi 0, %s352
                %p349 = scmp.ge.s32.totalorder %s348, 1
                %s353 = sphi %s322, %s322
                %s354 = sphi %s333, %s333
              $region55: #{conv1x1_pad1_add.1} parent=51 // loop_header_branch
                %351 = sbr.rel (%p349) target = $region59
              $region56: #{conv1x1_pad1_add.1} parent=51 // loop_body
                %v355 = vld [vmem:[%s353] sm:%s346]
                %356 = vst [vmem:[%s354] sm:%s346] %v355
              $region57: #{conv1x1_pad1_add.1} parent=51 // loop_footer
                %s352 = sadd.s32 1, %s348
              $region58: #{conv1x1_pad1_add.1} parent=51 // loop_footer_branch
                %347 = sbr.rel target = $region54
              $region59: #{conv1x1_pad1_add.1} parent=51 // loop_exit
                _
            $region52: #{conv1x1_pad1_add.1} parent=43 // pred_fallthru
              _
          $region44: #{conv1x1_pad1_add.1} parent=39 // pred_fallthru
            _
          %596 = vnop
        $region40: #{conv1x1_pad1_add.1} parent=35 // pred_fallthru
          _
      $region36: #{conv1x1_pad1_add.1} parent=5 // pred_fallthru
        _
      %p597 = scmp.le.s32.totalorder 2, %s10
      // Predicated region
      $region103: #{conv1x1_pad1_add.1} parent=5 // pred_check
        %p598 = pneg %p597
      $region104: #{conv1x1_pad1_add.1} parent=5 // pred_check_branch
        %600 = sbr.rel (%p598) target = $region106
      $region105: #{conv1x1_pad1_add.1} parent=5 // pred_region
        %s601 = ssub.s32 %s10, 2
        // Predicated region
        $region107: #{conv1x1_pad1_add.1} parent=105 // pred_check
          %p602 = pneg %p133
        $region108: #{conv1x1_pad1_add.1} parent=105 // pred_check_branch
          %604 = sbr.rel (%p602) target = $region110
        $region109: #{conv1x1_pad1_add.1} parent=105 // pred_region
          %s605 = sand.u32 %s118, 1
          %s606 = sand.u32 %s118, 1
          %s607 = smul.addr %s606, 16
          %s608 = scalar_lea.vmem [#allocation2], %s607
        $region110: #{conv1x1_pad1_add.1} parent=105 // pred_fallthru
          _
      $region106: #{conv1x1_pad1_add.1} parent=5 // pred_fallthru
        _
    $region6: #{conv1x1_pad1_add.1} parent=1 // loop_footer
      %s14 = sadd.s32 1, %s10
    $region7: #{conv1x1_pad1_add.1} parent=1 // loop_footer_branch
      %9 = sbr.rel target = $region3
    $region8: #{conv1x1_pad1_add.1} parent=1 // loop_exit
      _

</llo_original>
